<compile_context>
chip_gen: v7x
topology: tpu7x:2x2x1
jax: 0.10.0
libtpu: 0.0.40
codegen_flags: <defaults>
</compile_context>

<pallas_src>
import jax
import jax.numpy as jnp
from jax import lax
from jax.experimental import pallas as pl
from jax.experimental.pallas import tpu as pltpu

EPS = 1e-5  # nn.LayerNorm default


def _layernorm_kernel(x_ref, gamma_ref, beta_ref, o_ref):
    # x_ref: (bc_tile, F, tile_t); gamma/beta: (1, F, 1) float32.
    x = x_ref[...].astype(jnp.float32)
    # Normalize over F = axis -2 (sublane axis); keep lanes (T) intact.
    mean = jnp.mean(x, axis=-2, keepdims=True)
    centered = x - mean
    var = jnp.mean(centered * centered, axis=-2, keepdims=True)
    inv_std = lax.rsqrt(var + EPS)  # EUP; that slot is otherwise idle
    y = centered * inv_std * gamma_ref[...] + beta_ref[...]
    o_ref[...] = y.astype(o_ref.dtype)


def cnn_layer_norm(x, gamma, beta):
    """x: (B, C, F, T). gamma, beta: (F,). Returns (B, C, F, T)."""
    B, C, F, T = x.shape
    BC = B * C
    # Free reshape (collapses contiguous leading dims; no data movement).
    x3 = x.reshape(BC, F, T)

    itemsize = jnp.dtype(x.dtype).itemsize

    # Lane tile over T: full T if small, else a 128-multiple (partial last
    # block handled by pl.cdiv + Pallas boundary masking).
    if T <= 512:
        tile_t = T
    else:
        tile_t = 512

    # Leading tile over B*C sized so each block is ~2 MiB: big enough to
    # amortize the ~0.35 us per-grid-step overhead and approach the HBM
    # streaming bound, small enough that 2*(in+out) double-buffered blocks
    # stay far under v7x's scoped VMEM budget.
    target_bytes = 2 * 1024 * 1024
    per_bc_bytes = F * tile_t * itemsize
    bc_tile = int(max(1, min(BC, target_bytes // per_bc_bytes)))

    grid = (pl.cdiv(BC, bc_tile), pl.cdiv(T, tile_t))

    # Keep affine params in float32 end-to-end (no round-trip through x.dtype).
    gamma3 = gamma.astype(jnp.float32).reshape(1, F, 1)
    beta3 = beta.astype(jnp.float32).reshape(1, F, 1)

    out3 = pl.pallas_call(
        _layernorm_kernel,
        out_shape=jax.ShapeDtypeStruct((BC, F, T), x.dtype),
        grid_spec=pltpu.PrefetchScalarGridSpec(
            num_scalar_prefetch=0,
            grid=grid,
            in_specs=[
                pl.BlockSpec((bc_tile, F, tile_t), lambda i, j: (i, 0, j)),
                pl.BlockSpec((1, F, 1), lambda i, j: (0, 0, 0)),
                pl.BlockSpec((1, F, 1), lambda i, j: (0, 0, 0)),
            ],
            out_specs=pl.BlockSpec((bc_tile, F, tile_t), lambda i, j: (i, 0, j)),
        ),
        compiler_params=pltpu.CompilerParams(
            # Both grid axes are independent rows/columns of normalization
            # groups -> shard across TensorCores (v7x megacore).
            dimension_semantics=("parallel", "parallel"),
            # Explicit, generation-safe VMEM budget (raises v5e's 16 MiB
            # default; well under v7x's 64 MiB physical).
            vmem_limit_bytes=32 * 1024 * 1024,
        ),
    )(x3, gamma3, beta3)

    # Free reshape back.
    return out3.reshape(B, C, F, T)


def _reference(x, gamma, beta):
    # Transposes cancel: LayerNorm over axis 2 (F) with per-F affine.
    xf = x.astype(jnp.float32)
    mean = jnp.mean(xf, axis=2, keepdims=True)
    var = jnp.mean((xf - mean) ** 2, axis=2, keepdims=True)
    xhat = (xf - mean) / jnp.sqrt(var + EPS)
    F = x.shape[2]
    y = xhat * gamma.astype(jnp.float32).reshape(1, 1, F, 1) \
        + beta.astype(jnp.float32).reshape(1, 1, F, 1)
    return y.astype(x.dtype)


if __name__ == "__main__":
    key = jax.random.PRNGKey(0)
    kx, kg, kb = jax.random.split(key, 3)

    B, C, F, T = 2, 4, 16, 16   # x: (batch, channel, n_feats, time); n_feats=16
    x = jax.random.normal(kx, (B, C, F, T), dtype=jnp.float32)

    # nn.LayerNorm default init is gamma=1, beta=0; perturb so the affine
    # path is actually exercised.
    gamma = 1.0 + 0.1 * jax.random.normal(kg, (F,), dtype=jnp.float32)
    beta = 0.1 * jax.random.normal(kb, (F,), dtype=jnp.float32)

    out = cnn_layer_norm(x, gamma, beta)
    out = jax.block_until_ready(out)

    ref = _reference(x, gamma, beta)
    assert out.shape == (B, C, F, T)
    assert jnp.allclose(out, ref, atol=1e-5, rtol=1e-5), "mismatch vs reference"

    print("KERNEL_OK")
</pallas_src>

<mosaic_0001>
module attributes {stable_mosaic.version = 11 : i64} {
  func.func @_layernorm_kernel(%arg0: i32, %arg1: i32, %arg2: memref<8x16x16xf32, #tpu.memory_space<vmem>>, %arg3: memref<1x16x1xf32, #tpu.memory_space<vmem>>, %arg4: memref<1x16x1xf32, #tpu.memory_space<vmem>>, %arg5: memref<8x16x16xf32, #tpu.memory_space<vmem>>) attributes {dimension_semantics = [#tpu.dimension_semantics<parallel>, #tpu.dimension_semantics<parallel>], iteration_bounds = array<i64: 1, 1>, scalar_prefetch = 0 : i64, scratch_operands = 0 : i64, tpu.core_type = #tpu.core_type<tc>, window_params = [{transform_indices = @transform_0, window_bounds = array<i64: 8, 16, 16>}, {pipeline_mode = #tpu.pipeline_mode<synchronous>, transform_indices = @transform_1, window_bounds = array<i64: 1, 16, 1>}, {pipeline_mode = #tpu.pipeline_mode<synchronous>, transform_indices = @transform_2, window_bounds = array<i64: 1, 16, 1>}, {transform_indices = @transform_3, window_bounds = array<i64: 8, 16, 16>}]} {
    %c0 = arith.constant 0 : index
    %c0_0 = arith.constant 0 : index
    %c0_1 = arith.constant 0 : index
    %0 = vector.load %arg2[%c0, %c0_0, %c0_1] : memref<8x16x16xf32, #tpu.memory_space<vmem>>, vector<8x16x16xf32>
    %cst = arith.constant dense<0.000000e+00> : vector<8x16xf32>
    %1 = vector.multi_reduction <add>, %0, %cst [1] : vector<8x16x16xf32> to vector<8x16xf32>
    %2 = vector.shape_cast %1 : vector<8x16xf32> to vector<8x1x16xf32>
    %cst_2 = arith.constant 1.600000e+01 : f32
    %3 = vector.broadcast %cst_2 : f32 to vector<8x1x16xf32>
    %4 = arith.divf %2, %3 : vector<8x1x16xf32>
    %5 = vector.broadcast %4 : vector<8x1x16xf32> to vector<8x16x16xf32>
    %6 = arith.subf %0, %5 : vector<8x16x16xf32>
    %7 = arith.mulf %6, %6 : vector<8x16x16xf32>
    %cst_3 = arith.constant dense<0.000000e+00> : vector<8x16xf32>
    %8 = vector.multi_reduction <add>, %7, %cst_3 [1] : vector<8x16x16xf32> to vector<8x16xf32>
    %9 = vector.shape_cast %8 : vector<8x16xf32> to vector<8x1x16xf32>
    %cst_4 = arith.constant 1.600000e+01 : f32
    %10 = vector.broadcast %cst_4 : f32 to vector<8x1x16xf32>
    %11 = arith.divf %9, %10 : vector<8x1x16xf32>
    %cst_5 = arith.constant 9.99999974E-6 : f32
    %12 = vector.broadcast %cst_5 : f32 to vector<8x1x16xf32>
    %13 = arith.addf %11, %12 : vector<8x1x16xf32>
    %14 = math.rsqrt %13 : vector<8x1x16xf32>
    %15 = vector.broadcast %14 : vector<8x1x16xf32> to vector<8x16x16xf32>
    %16 = arith.mulf %6, %15 : vector<8x16x16xf32>
    %c0_6 = arith.constant 0 : index
    %c0_7 = arith.constant 0 : index
    %c0_8 = arith.constant 0 : index
    %17 = vector.load %arg3[%c0_6, %c0_7, %c0_8] : memref<1x16x1xf32, #tpu.memory_space<vmem>>, vector<1x16x1xf32>
    %18 = vector.broadcast %17 : vector<1x16x1xf32> to vector<8x16x16xf32>
    %19 = arith.mulf %16, %18 : vector<8x16x16xf32>
    %c0_9 = arith.constant 0 : index
    %c0_10 = arith.constant 0 : index
    %c0_11 = arith.constant 0 : index
    %20 = vector.load %arg4[%c0_9, %c0_10, %c0_11] : memref<1x16x1xf32, #tpu.memory_space<vmem>>, vector<1x16x1xf32>
    %21 = vector.broadcast %20 : vector<1x16x1xf32> to vector<8x16x16xf32>
    %22 = arith.addf %19, %21 : vector<8x16x16xf32>
    %c0_12 = arith.constant 0 : index
    %c0_13 = arith.constant 0 : index
    %c0_14 = arith.constant 0 : index
    %23 = vector.load %arg5[%c0_12, %c0_13, %c0_14] : memref<8x16x16xf32, #tpu.memory_space<vmem>>, vector<8x16x16xf32>
    tpu.vector_store %arg5[%c0_12, %c0_13, %c0_14], %22 {strides = array<i32>} : memref<8x16x16xf32, #tpu.memory_space<vmem>>, vector<8x16x16xf32>,
    return
  }
  func.func @transform_0(%arg0: i32, %arg1: i32) -> (i32, i32, i32) {
    %c0_i32 = arith.constant 0 : i32
    %c0_i32_0 = arith.constant 0 : i32
    return %arg0, %c0_i32, %arg1 : i32, i32, i32
  }
  func.func @transform_1(%arg0: i32, %arg1: i32) -> (i32, i32, i32) {
    %c0_i32 = arith.constant 0 : i32
    %c0_i32_0 = arith.constant 0 : i32
    %c0_i32_1 = arith.constant 0 : i32
    %c0_i32_2 = arith.constant 0 : i32
    return %c0_i32, %c0_i32_0, %c0_i32_1 : i32, i32, i32
  }
  func.func @transform_2(%arg0: i32, %arg1: i32) -> (i32, i32, i32) {
    %c0_i32 = arith.constant 0 : i32
    %c0_i32_0 = arith.constant 0 : i32
    %c0_i32_1 = arith.constant 0 : i32
    %c0_i32_2 = arith.constant 0 : i32
    return %c0_i32, %c0_i32_0, %c0_i32_1 : i32, i32, i32
  }
  func.func @transform_3(%arg0: i32, %arg1: i32) -> (i32, i32, i32) {
    %c0_i32 = arith.constant 0 : i32
    %c0_i32_0 = arith.constant 0 : i32
    return %arg0, %c0_i32, %arg1 : i32, i32, i32
  }
}

</mosaic_0001>

<llo_original>
// kernel: tpu_custom_call.1
$region0: #{tpu_custom_call.1}
  #allocation0 [shape = 'u32[]', space=smem, size = 0x4, offset = 0x4, fixed_abs, tag = 'smem constant byte address 0x4 - core index']
  #allocation1 [shape = 'u32[144,128]{1,0:T(1,128)}', space=vmem, size = 0x12000, scoped, tag = 'internal scratch']
  %s0 = inlined_call_operand.hbm [shape: f32[8,16,16], index: 0, kind: input, shape index: {}]
  %s1 = inlined_call_operand.vmem [shape: f32[1,16,1], index: 1, kind: input, shape index: {}]
  %s2 = inlined_call_operand.vmem [shape: f32[1,16,1], index: 2, kind: input, shape index: {}]
  %s3 = inlined_call_operand.hbm [shape: f32[8,16,16], index: 3, kind: output, shape index: {}]
  %s4 = sld [smem:[#allocation0]]
  $region26: #{tpu_custom_call.1} parent=0
    _
  %s6 = ssub.s32 1, %s4
  %s7 = scalar_select 0, %s6, %s4
  $region1: #{tpu_custom_call.1} parent=0
    #allocation2 [shape = 'u8[65536]{0}', space=vmem, size = 0x10000, scoped, tag = 'input window, operand 0, single buffered']
    #allocation3 [shape = 's32[1]{0}', space=sflag, size = 0x4, scoped, tag = 'scoped memory for tpu_custom_call.1']
    #allocation4 [shape = 's32[1]{0}', space=sflag, size = 0x4, scoped, tag = 'scoped memory for tpu_custom_call.1']
    #allocation5 [shape = 'u8[65536]{0}', space=vmem, size = 0x10000, scoped, tag = 'output window, operand 0, single buffered']
    %8 = vsyncpa [#allocation3], 0
    %9 = vsyncpa [#allocation4], 0
    // Predicated region
    $region2: #{tpu_custom_call.1} parent=1 // pred_check
      _
    $region3: #{tpu_custom_call.1} parent=1 // pred_check_branch
      %11 = sbr.rel (0) target = $region5
    $region4: #{tpu_custom_call.1} parent=1 // pred_region
      %s13 = ssub.s32 2048, 2048
      %14 = vsyncadd [#allocation3], %s13
      %s15 = sshll.u32 [#allocation2], 4
      %s16 = int_to_ptr.vmem [resolvable:$true] %s15
      %21 = dma.hbm_to_vmem [thread:$0]  %s0, 2048, %s16, [#allocation3], 128, 128, 8
    $region5: #{tpu_custom_call.1} parent=1 // pred_fallthru
      _
    // Predicated region
    $region6: #{tpu_custom_call.1} parent=1 // pred_check
      _
    $region7: #{tpu_custom_call.1} parent=1 // pred_check_branch
      %23 = sbr.rel (0) target = $region9
    $region8: #{tpu_custom_call.1} parent=1 // pred_region
      _
    $region9: #{tpu_custom_call.1} parent=1 // pred_fallthru
      _
    // Predicated region
    $region10: #{tpu_custom_call.1} parent=1 // pred_check
      _
    $region11: #{tpu_custom_call.1} parent=1 // pred_check_branch
      %25 = sbr.rel (0) target = $region13
    $region12: #{tpu_custom_call.1} parent=1 // pred_region
      _
    $region13: #{tpu_custom_call.1} parent=1 // pred_fallthru
      _
    // Predicated region
    $region14: #{tpu_custom_call.1} parent=1 // pred_check
      _
    $region15: #{tpu_custom_call.1} parent=1 // pred_check_branch
      %27 = sbr.rel (0) target = $region17
    $region16: #{tpu_custom_call.1} parent=1 // pred_region
      %28 = dma.done [#allocation3], 2048
    $region17: #{tpu_custom_call.1} parent=1 // pred_fallthru
      _
    %v29 = vld [vmem:[#allocation2] sm:$0xff]
    %v30 = vld [vmem:[#allocation2 + $0x8] sm:$0xff]
    %v31 = vld [vmem:[#allocation2 + $0x10] sm:$0xff]
    %v32 = vld [vmem:[#allocation2 + $0x18] sm:$0xff]
    %v33 = vld [vmem:[#allocation2 + $0x20] sm:$0xff]
    %v34 = vld [vmem:[#allocation2 + $0x28] sm:$0xff]
    %v35 = vld [vmem:[#allocation2 + $0x30] sm:$0xff]
    %v36 = vld [vmem:[#allocation2 + $0x38] sm:$0xff]
    %v37 = vld [vmem:[#allocation2 + $0x40] sm:$0xff]
    %v38 = vld [vmem:[#allocation2 + $0x48] sm:$0xff]
    %v39 = vld [vmem:[#allocation2 + $0x50] sm:$0xff]
    %v40 = vld [vmem:[#allocation2 + $0x58] sm:$0xff]
    %v41 = vld [vmem:[#allocation2 + $0x60] sm:$0xff]
    %v42 = vld [vmem:[#allocation2 + $0x68] sm:$0xff]
    %v43 = vld [vmem:[#allocation2 + $0x70] sm:$0xff]
    %v44 = vld [vmem:[#allocation2 + $0x78] sm:$0xff]
    %vm45 = vcmask 130048
    %v46 = vsel %vm45, %v29, 0.0
    %v47 = vsel %vm45, %v30, 0.0
    %v48 = vadd.f32 %v46, %v47
    %v49 = vrot.slane %v48, 4
    %v50 = vadd.f32 %v48, %v49
    %v51 = vrot.slane %v50, 2
    %v52 = vadd.f32 %v50, %v51
    %v53 = vrot.slane %v52, 1
    %v54 = vadd.f32 %v52, %v53
    %v55 = vsel %vm45, %v31, 0.0
    %v56 = vsel %vm45, %v32, 0.0
    %v57 = vadd.f32 %v55, %v56
    %v58 = vrot.slane %v57, 4
    %v59 = vadd.f32 %v57, %v58
    %v60 = vrot.slane %v59, 2
    %v61 = vadd.f32 %v59, %v60
    %v62 = vrot.slane %v61, 1
    %v63 = vadd.f32 %v61, %v62
    %v64 = vsel %vm45, %v33, 0.0
    %v65 = vsel %vm45, %v34, 0.0
    %v66 = vadd.f32 %v64, %v65
    %v67 = vrot.slane %v66, 4
    %v68 = vadd.f32 %v66, %v67
    %v69 = vrot.slane %v68, 2
    %v70 = vadd.f32 %v68, %v69
    %v71 = vrot.slane %v70, 1
    %v72 = vadd.f32 %v70, %v71
    %v73 = vsel %vm45, %v35, 0.0
    %v74 = vsel %vm45, %v36, 0.0
    %v75 = vadd.f32 %v73, %v74
    %v76 = vrot.slane %v75, 4
    %v77 = vadd.f32 %v75, %v76
    %v78 = vrot.slane %v77, 2
    %v79 = vadd.f32 %v77, %v78
    %v80 = vrot.slane %v79, 1
    %v81 = vadd.f32 %v79, %v80
    %v82 = vsel %vm45, %v37, 0.0
    %v83 = vsel %vm45, %v38, 0.0
    %v84 = vadd.f32 %v82, %v83
    %v85 = vrot.slane %v84, 4
    %v86 = vadd.f32 %v84, %v85
    %v87 = vrot.slane %v86, 2
    %v88 = vadd.f32 %v86, %v87
    %v89 = vrot.slane %v88, 1
    %v90 = vadd.f32 %v88, %v89
    %v91 = vsel %vm45, %v39, 0.0
    %v92 = vsel %vm45, %v40, 0.0
    %v93 = vadd.f32 %v91, %v92
    %v94 = vrot.slane %v93, 4
    %v95 = vadd.f32 %v93, %v94
    %v96 = vrot.slane %v95, 2
    %v97 = vadd.f32 %v95, %v96
    %v98 = vrot.slane %v97, 1
    %v99 = vadd.f32 %v97, %v98
    %v100 = vsel %vm45, %v41, 0.0
    %v101 = vsel %vm45, %v42, 0.0
    %v102 = vadd.f32 %v100, %v101
    %v103 = vrot.slane %v102, 4
    %v104 = vadd.f32 %v102, %v103
    %v105 = vrot.slane %v104, 2
    %v106 = vadd.f32 %v104, %v105
    %v107 = vrot.slane %v106, 1
    %v108 = vadd.f32 %v106, %v107
    %v109 = vsel %vm45, %v43, 0.0
    %v110 = vsel %vm45, %v44, 0.0
    %v111 = vadd.f32 %v109, %v110
    %v112 = vrot.slane %v111, 4
    %v113 = vadd.f32 %v111, %v112
    %v114 = vrot.slane %v113, 2
    %v115 = vadd.f32 %v113, %v114
    %v116 = vrot.slane %v115, 1
    %v117 = vadd.f32 %v115, %v116
    %v118 = vrcp.pop 16.0
    %v119 = vmul.f32 %v54, %v118
    %v120 = vmul.f32 %v63, %v118
    %v121 = vmul.f32 %v72, %v118
    %v122 = vmul.f32 %v81, %v118
    %v123 = vmul.f32 %v90, %v118
    %v124 = vmul.f32 %v99, %v118
    %v125 = vmul.f32 %v108, %v118
    %v126 = vmul.f32 %v117, %v118
    %v127 = vsub.f32 %v29, %v119
    %v128 = vsub.f32 %v30, %v119
    %v129 = vsub.f32 %v31, %v120
    %v130 = vsub.f32 %v32, %v120
    %v131 = vsub.f32 %v33, %v121
    %v132 = vsub.f32 %v34, %v121
    %v133 = vsub.f32 %v35, %v122
    %v134 = vsub.f32 %v36, %v122
    %v135 = vsub.f32 %v37, %v123
    %v136 = vsub.f32 %v38, %v123
    %v137 = vsub.f32 %v39, %v124
    %v138 = vsub.f32 %v40, %v124
    %v139 = vsub.f32 %v41, %v125
    %v140 = vsub.f32 %v42, %v125
    %v141 = vsub.f32 %v43, %v126
    %v142 = vsub.f32 %v44, %v126
    %v143 = vmul.f32 %v127, %v127
    %v144 = vmul.f32 %v128, %v128
    %v145 = vmul.f32 %v129, %v129
    %v146 = vmul.f32 %v130, %v130
    %v147 = vmul.f32 %v131, %v131
    %v148 = vmul.f32 %v132, %v132
    %v149 = vmul.f32 %v133, %v133
    %v150 = vmul.f32 %v134, %v134
    %v151 = vmul.f32 %v135, %v135
    %v152 = vmul.f32 %v136, %v136
    %v153 = vmul.f32 %v137, %v137
    %v154 = vmul.f32 %v138, %v138
    %v155 = vmul.f32 %v139, %v139
    %v156 = vmul.f32 %v140, %v140
    %v157 = vmul.f32 %v141, %v141
    %v158 = vmul.f32 %v142, %v142
    %v159 = vsel %vm45, %v143, 0.0
    %v160 = vsel %vm45, %v144, 0.0
    %v161 = vadd.f32 %v159, %v160
    %v162 = vrot.slane %v161, 4
    %v163 = vadd.f32 %v161, %v162
    %v164 = vrot.slane %v163, 2
    %v165 = vadd.f32 %v163, %v164
    %v166 = vrot.slane %v165, 1
    %v167 = vadd.f32 %v165, %v166
    %v168 = vsel %vm45, %v145, 0.0
    %v169 = vsel %vm45, %v146, 0.0
    %v170 = vadd.f32 %v168, %v169
    %v171 = vrot.slane %v170, 4
    %v172 = vadd.f32 %v170, %v171
    %v173 = vrot.slane %v172, 2
    %v174 = vadd.f32 %v172, %v173
    %v175 = vrot.slane %v174, 1
    %v176 = vadd.f32 %v174, %v175
    %v177 = vsel %vm45, %v147, 0.0
    %v178 = vsel %vm45, %v148, 0.0
    %v179 = vadd.f32 %v177, %v178
    %v180 = vrot.slane %v179, 4
    %v181 = vadd.f32 %v179, %v180
    %v182 = vrot.slane %v181, 2
    %v183 = vadd.f32 %v181, %v182
    %v184 = vrot.slane %v183, 1
    %v185 = vadd.f32 %v183, %v184
    %v186 = vsel %vm45, %v149, 0.0
    %v187 = vsel %vm45, %v150, 0.0
    %v188 = vadd.f32 %v186, %v187
    %v189 = vrot.slane %v188, 4
    %v190 = vadd.f32 %v188, %v189
    %v191 = vrot.slane %v190, 2
    %v192 = vadd.f32 %v190, %v191
    %v193 = vrot.slane %v192, 1
    %v194 = vadd.f32 %v192, %v193
    %v195 = vsel %vm45, %v151, 0.0
    %v196 = vsel %vm45, %v152, 0.0
    %v197 = vadd.f32 %v195, %v196
    %v198 = vrot.slane %v197, 4
    %v199 = vadd.f32 %v197, %v198
    %v200 = vrot.slane %v199, 2
    %v201 = vadd.f32 %v199, %v200
    %v202 = vrot.slane %v201, 1
    %v203 = vadd.f32 %v201, %v202
    %v204 = vsel %vm45, %v153, 0.0
    %v205 = vsel %vm45, %v154, 0.0
    %v206 = vadd.f32 %v204, %v205
    %v207 = vrot.slane %v206, 4
    %v208 = vadd.f32 %v206, %v207
    %v209 = vrot.slane %v208, 2
    %v210 = vadd.f32 %v208, %v209
    %v211 = vrot.slane %v210, 1
    %v212 = vadd.f32 %v210, %v211
    %v213 = vsel %vm45, %v155, 0.0
    %v214 = vsel %vm45, %v156, 0.0
    %v215 = vadd.f32 %v213, %v214
    %v216 = vrot.slane %v215, 4
    %v217 = vadd.f32 %v215, %v216
    %v218 = vrot.slane %v217, 2
    %v219 = vadd.f32 %v217, %v218
    %v220 = vrot.slane %v219, 1
    %v221 = vadd.f32 %v219, %v220
    %v222 = vsel %vm45, %v157, 0.0
    %v223 = vsel %vm45, %v158, 0.0
    %v224 = vadd.f32 %v222, %v223
    %v225 = vrot.slane %v224, 4
    %v226 = vadd.f32 %v224, %v225
    %v227 = vrot.slane %v226, 2
    %v228 = vadd.f32 %v226, %v227
    %v229 = vrot.slane %v228, 1
    %v230 = vadd.f32 %v228, %v229
    %v231 = vmul.f32 %v167, %v118
    %v232 = vmul.f32 %v176, %v118
    %v233 = vmul.f32 %v185, %v118
    %v234 = vmul.f32 %v194, %v118
    %v235 = vmul.f32 %v203, %v118
    %v236 = vmul.f32 %v212, %v118
    %v237 = vmul.f32 %v221, %v118
    %v238 = vmul.f32 %v230, %v118
    %v239 = vadd.f32 %v231, 1e-05
    %v240 = vadd.f32 %v232, 1e-05
    %v241 = vadd.f32 %v233, 1e-05
    %v242 = vadd.f32 %v234, 1e-05
    %v243 = vadd.f32 %v235, 1e-05
    %v244 = vadd.f32 %v236, 1e-05
    %v245 = vadd.f32 %v237, 1e-05
    %v246 = vadd.f32 %v238, 1e-05
    %v247 = vrsqrt.pop %v239
    %v248 = vrsqrt.pop %v240
    %v249 = vrsqrt.pop %v241
    %v250 = vrsqrt.pop %v242
    %v251 = vrsqrt.pop %v243
    %v252 = vrsqrt.pop %v244
    %v253 = vrsqrt.pop %v245
    %v254 = vrsqrt.pop %v246
    %v255 = vmul.f32 %v127, %v247
    %v256 = vmul.f32 %v128, %v247
    %v257 = vmul.f32 %v129, %v248
    %v258 = vmul.f32 %v130, %v248
    %v259 = vmul.f32 %v131, %v249
    %v260 = vmul.f32 %v132, %v249
    %v261 = vmul.f32 %v133, %v250
    %v262 = vmul.f32 %v134, %v250
    %v263 = vmul.f32 %v135, %v251
    %v264 = vmul.f32 %v136, %v251
    %v265 = vmul.f32 %v137, %v252
    %v266 = vmul.f32 %v138, %v252
    %v267 = vmul.f32 %v139, %v253
    %v268 = vmul.f32 %v140, %v253
    %v269 = vmul.f32 %v141, %v254
    %v270 = vmul.f32 %v142, %v254
    %v271 = vld [vmem:[%s1] sm:$0xff]
    %v272 = vld [vmem:[%s1 + $0x8] sm:$0xff]
    %274 = vset.pattern.permute.xlu0 0
    %275 = vperm.xlu0 %274, %v271
    %v276 = vpop.permute.xlu0 %275
    %279 = vset.pattern.permute.xlu0 0
    %280 = vperm.xlu0 %279, %v272
    %v281 = vpop.permute.xlu0 %280
    %v283 = vmul.f32 %v255, %v276
    %v284 = vmul.f32 %v256, %v281
    %v285 = vmul.f32 %v257, %v276
    %v286 = vmul.f32 %v258, %v281
    %v287 = vmul.f32 %v259, %v276
    %v288 = vmul.f32 %v260, %v281
    %v289 = vmul.f32 %v261, %v276
    %v290 = vmul.f32 %v262, %v281
    %v291 = vmul.f32 %v263, %v276
    %v292 = vmul.f32 %v264, %v281
    %v293 = vmul.f32 %v265, %v276
    %v294 = vmul.f32 %v266, %v281
    %v295 = vmul.f32 %v267, %v276
    %v296 = vmul.f32 %v268, %v281
    %v297 = vmul.f32 %v269, %v276
    %v298 = vmul.f32 %v270, %v281
    %v299 = vld [vmem:[%s2] sm:$0xff]
    %v300 = vld [vmem:[%s2 + $0x8] sm:$0xff]
    %302 = vset.pattern.permute.xlu0 0
    %303 = vperm.xlu0 %302, %v299
    %v304 = vpop.permute.xlu0 %303
    %307 = vset.pattern.permute.xlu0 0
    %308 = vperm.xlu0 %307, %v300
    %v309 = vpop.permute.xlu0 %308
    %v311 = vadd.f32 %v283, %v304
    %v312 = vadd.f32 %v284, %v309
    %v313 = vadd.f32 %v285, %v304
    %v314 = vadd.f32 %v286, %v309
    %v315 = vadd.f32 %v287, %v304
    %v316 = vadd.f32 %v288, %v309
    %v317 = vadd.f32 %v289, %v304
    %v318 = vadd.f32 %v290, %v309
    %v319 = vadd.f32 %v291, %v304
    %v320 = vadd.f32 %v292, %v309
    %v321 = vadd.f32 %v293, %v304
    %v322 = vadd.f32 %v294, %v309
    %v323 = vadd.f32 %v295, %v304
    %v324 = vadd.f32 %v296, %v309
    %v325 = vadd.f32 %v297, %v304
    %v326 = vadd.f32 %v298, %v309
    %327 = vst.msk [vmem:[#allocation5] sm:$0xff] %vm45, %v311
    %328 = vst.msk [vmem:[#allocation5 + $0x8] sm:$0xff] %vm45, %v312
    %329 = vst.msk [vmem:[#allocation5 + $0x10] sm:$0xff] %vm45, %v313
    %330 = vst.msk [vmem:[#allocation5 + $0x18] sm:$0xff] %vm45, %v314
    %331 = vst.msk [vmem:[#allocation5 + $0x20] sm:$0xff] %vm45, %v315
    %332 = vst.msk [vmem:[#allocation5 + $0x28] sm:$0xff] %vm45, %v316
    %333 = vst.msk [vmem:[#allocation5 + $0x30] sm:$0xff] %vm45, %v317
    %334 = vst.msk [vmem:[#allocation5 + $0x38] sm:$0xff] %vm45, %v318
    %335 = vst.msk [vmem:[#allocation5 + $0x40] sm:$0xff] %vm45, %v319
    %336 = vst.msk [vmem:[#allocation5 + $0x48] sm:$0xff] %vm45, %v320
    %337 = vst.msk [vmem:[#allocation5 + $0x50] sm:$0xff] %vm45, %v321
    %338 = vst.msk [vmem:[#allocation5 + $0x58] sm:$0xff] %vm45, %v322
    %339 = vst.msk [vmem:[#allocation5 + $0x60] sm:$0xff] %vm45, %v323
    %340 = vst.msk [vmem:[#allocation5 + $0x68] sm:$0xff] %vm45, %v324
    %341 = vst.msk [vmem:[#allocation5 + $0x70] sm:$0xff] %vm45, %v325
    %342 = vst.msk [vmem:[#allocation5 + $0x78] sm:$0xff] %vm45, %v326
    // Predicated region
    $region18: #{tpu_custom_call.1} parent=1 // pred_check
      _
    $region19: #{tpu_custom_call.1} parent=1 // pred_check_branch
      %344 = sbr.rel (0) target = $region21
    $region20: #{tpu_custom_call.1} parent=1 // pred_region
      %s346 = ssub.s32 2048, 2048
      %347 = vsyncadd [#allocation4], %s346
      %s348 = sshll.u32 [#allocation5], 4
      %s349 = int_to_ptr.vmem [resolvable:$true] %s348
      %354 = dma.vmem_to_hbm [thread:$0]  %s349, 2048, %s3, [#allocation4], 128, 128, 8
    $region21: #{tpu_custom_call.1} parent=1 // pred_fallthru
      _
    // Predicated region
    $region22: #{tpu_custom_call.1} parent=1 // pred_check
      _
    $region23: #{tpu_custom_call.1} parent=1 // pred_check_branch
      %356 = sbr.rel (0) target = $region25
    $region24: #{tpu_custom_call.1} parent=1 // pred_region
      %357 = dma.done [#allocation4], 2048
    $region25: #{tpu_custom_call.1} parent=1 // pred_fallthru
      _
    %358 = vsyncpa [#allocation3], 1
    %359 = vsyncpa [#allocation4], 1

</llo_original>
